<compile_context>
chip_gen: v7x
topology: tpu7x:2x2x1
jax: 0.10.0
libtpu: 0.0.40
codegen_flags: <defaults>
</compile_context>

<pallas_src>
import functools

import jax
import jax.numpy as jnp
from jax.experimental import pallas as pl
from jax.experimental.pallas import tpu as pltpu

# ---- model hyper-params (small, deterministic; match the module spec) ----
B = 2        # batch
L = 8        # sequence length
M = 32       # model dim (m_dim)
H = 2        # n_head
DK = 16      # d_k
DV = 16      # d_v
TEMP = float(DK) ** 0.5
LN_EPS = 1e-5


def encoder_layer_kernel(x_ref, wqkv_ref, fcw_ref, vec_ref, o_ref, *, n_head, d_k, d_v):
    """One batch block per grid step.

    x_ref    : (bpb, L, M)                     input block (residual stream)
    wqkv_ref : (M, 2*n_head*d_k + n_head*d_v)  fused [W_q/sqrt(d_k) | W_k | W_v]
    fcw_ref  : (n_head*d_v, M)                 fc weight, (in, out) layout
    vec_ref  : (3, M)                          [fc bias ; ln gamma ; ln beta]
    o_ref    : (bpb, L, M)
    """
    x = x_ref[...]                               # (bpb, L, M)
    fcw = fcw_ref[...]                           # (H*DV, M)
    fcb = vec_ref[0:1, :]                        # (1, M)
    gamma = vec_ref[1:2, :]                      # (1, M)
    beta = vec_ref[2:3, :]                       # (1, M)

    # Fused QKV projection for the whole batch block (single MXU pass).
    # For larger, MXU-bound sizes cast x / wqkv to bf16 here (keep f32 accumulation);
    # kept f32 at this toy size for bit-closer parity with the reference.
    qkv = jax.lax.dot_general(
        x, wqkv_ref[...],
        dimension_numbers=(((2,), (0,)), ((), ())),
        preferred_element_type=jnp.float32)      # (bpb, L, 2*H*DK + H*DV)

    q_base, k_base, v_base = 0, n_head * d_k, 2 * n_head * d_k

    # Residual + fc bias folded into the accumulator (broadcasts over (bpb, L)).
    y = x.astype(jnp.float32) + fcb              # (bpb, L, M) f32
    for hh in range(n_head):
        qh = qkv[:, :, q_base + hh * d_k:q_base + (hh + 1) * d_k]   # (bpb, L, DK)
        kh = qkv[:, :, k_base + hh * d_k:k_base + (hh + 1) * d_k]   # (bpb, L, DK)
        vh = qkv[:, :, v_base + hh * d_v:v_base + (hh + 1) * d_v]   # (bpb, L, DV)

        # Batched q @ k^T (1/sqrt(d_k) already folded into W_q).  No mask needed:
        # this grid step only ever sees keys of its own batch elements.
        scores = jax.lax.dot_general(
            qh, kh, dimension_numbers=(((2,), (2,)), ((0,), (0,))),
            preferred_element_type=jnp.float32)                     # (bpb, L, L)

        # Numerically-stable softmax over the key axis; approx reciprocal -> EUP slot.
        scores = scores - jnp.max(scores, axis=-1, keepdims=True)
        p = jnp.exp(scores)
        p = p * pl.reciprocal(jnp.sum(p, axis=-1, keepdims=True), approx=True)

        head = jax.lax.dot_general(
            p, vh, dimension_numbers=(((2,), (1,)), ((0,), (0,))),
            preferred_element_type=jnp.float32)                     # (bpb, L, DV)

        # Project through this head's row-slice of the fc weight and accumulate
        # (no lane-axis concatenation of heads).
        y = y + jax.lax.dot_general(
            head, fcw[hh * d_v:(hh + 1) * d_v, :],
            dimension_numbers=(((2,), (0,)), ((), ())),
            preferred_element_type=jnp.float32)                     # (bpb, L, M)

    # LayerNorm over the model dim; centered two-pass (biased) variance.
    mean = jnp.mean(y, axis=-1, keepdims=True)
    yc = y - mean
    var = jnp.mean(yc * yc, axis=-1, keepdims=True)
    norm = yc * jax.lax.rsqrt(var + LN_EPS)

    # Single store of the batch block (masked at M=32; lane-dense once M % 128 == 0).
    o_ref[...] = (norm * gamma + beta).astype(o_ref.dtype)


def fuse_params(wq, wk, wv, fcb, gamma, beta):
    """One-time parameter fusion, done OUTSIDE the per-call jitted path:
         * fold 1/sqrt(d_k) into the W_q columns and fuse [W_q | W_k | W_v],
         * pack fc bias / LN gamma / LN beta into a single (3, M) operand."""
    w_qkv = jnp.concatenate([wq * (1.0 / TEMP), wk, wv], axis=1)   # (M, 2*H*DK + H*DV)
    vec = jnp.concatenate([fcb, gamma, beta], axis=0)              # (3, M)
    return w_qkv, vec


def build_encoder_layer(batch, seq, m_dim, n_head, d_k, d_v, *, bpb=1):
    """Build the jitted encoder-layer forward. `bpb` = batch elements per grid step."""
    assert batch % bpb == 0
    qkv_w = 2 * n_head * d_k + n_head * d_v
    kernel = functools.partial(encoder_layer_kernel, n_head=n_head, d_k=d_k, d_v=d_v)

    call = pl.pallas_call(
        kernel,
        out_shape=jax.ShapeDtypeStruct((batch, seq, m_dim), jnp.float32),
        grid=(batch // bpb,),
        in_specs=[
            pl.BlockSpec((bpb, seq, m_dim), lambda b: (b, 0, 0)),   # activations
            pl.BlockSpec((m_dim, qkv_w), lambda b: (0, 0)),         # fused QKV weight
            pl.BlockSpec((n_head * d_v, m_dim), lambda b: (0, 0)),  # fc weight
            pl.BlockSpec((3, m_dim), lambda b: (0, 0)),             # bias/gamma/beta
        ],
        out_specs=pl.BlockSpec((bpb, seq, m_dim), lambda b: (b, 0, 0)),
        compiler_params=pltpu.CompilerParams(
            dimension_semantics=("parallel",)),                     # megacore on v7x
    )

    @jax.jit
    def encoder_layer(x, w_qkv, fcw, vec):
        return call(x, w_qkv, fcw, vec)

    return encoder_layer


def reference(x, wq, wk, wv, fcw, fcb, gamma, beta):
    """Pure-JAX reference matching the PyTorch forward (dropout = identity)."""
    q = x @ wq
    k = x @ wk
    v = x @ wv
    q = q.reshape(B, L, H, DK).transpose(2, 0, 1, 3).reshape(H * B, L, DK)
    k = k.reshape(B, L, H, DK).transpose(2, 0, 1, 3).reshape(H * B, L, DK)
    v = v.reshape(B, L, H, DV).transpose(2, 0, 1, 3).reshape(H * B, L, DV)
    attn = jnp.einsum("bqd,bkd->bqk", q, k) / TEMP
    attn = jax.nn.softmax(attn, axis=2)
    out = jnp.einsum("bqk,bkd->bqd", attn, v)
    out = out.reshape(H, B, L, DV).transpose(1, 2, 0, 3).reshape(B, L, H * DV)
    out = out @ fcw + fcb[0]
    y = out + x
    mean = jnp.mean(y, axis=-1, keepdims=True)
    var = jnp.mean((y - mean) ** 2, axis=-1, keepdims=True)
    return (y - mean) * jax.lax.rsqrt(var + LN_EPS) * gamma[0] + beta[0]


if __name__ == "__main__":
    key = jax.random.PRNGKey(0)
    kx, kq, kk, kv, kfw, kfb = jax.random.split(key, 6)

    x = jax.random.normal(kx, (B, L, M), dtype=jnp.float32)

    # Deterministic parameter init (the torch module leaves W_* uninitialized;
    # we fill them with small random values).
    wq = jax.random.normal(kq, (M, H * DK), dtype=jnp.float32) * 0.1
    wk = jax.random.normal(kk, (M, H * DK), dtype=jnp.float32) * 0.1
    wv = jax.random.normal(kv, (M, H * DV), dtype=jnp.float32) * 0.1
    fcw = jax.random.normal(kfw, (H * DV, M), dtype=jnp.float32) * 0.1  # (in, out) layout
    fcb = jax.random.normal(kfb, (1, M), dtype=jnp.float32) * 0.1
    gamma = jnp.ones((1, M), dtype=jnp.float32)
    beta = jnp.zeros((1, M), dtype=jnp.float32)

    # One-time parameter fusion (outside the jitted per-call path).
    w_qkv, vec = fuse_params(wq, wk, wv, fcb, gamma, beta)

    encoder_layer = build_encoder_layer(B, L, M, H, DK, DV, bpb=1)
    out = encoder_layer(x, w_qkv, fcw, vec)
    out = jax.block_until_ready(out)

    ref = reference(x, wq, wk, wv, fcw, fcb, gamma, beta)
    assert out.shape == (B, L, M)
    # Tolerance absorbs the documented approx-reciprocal softmax-denominator drift.
    assert jnp.allclose(out, ref, atol=2e-3, rtol=2e-3), "mismatch vs reference"

    print("KERNEL_OK")
</pallas_src>

<mosaic_0001>
module attributes {stable_mosaic.version = 11 : i64} {
  func.func @encoder_layer_kernel(%arg0: i32, %arg1: memref<1x8x32xf32, #tpu.memory_space<vmem>>, %arg2: memref<32x96xf32, #tpu.memory_space<vmem>>, %arg3: memref<32x32xf32, #tpu.memory_space<vmem>>, %arg4: memref<3x32xf32, #tpu.memory_space<vmem>>, %arg5: memref<1x8x32xf32, #tpu.memory_space<vmem>>) attributes {dimension_semantics = [#tpu.dimension_semantics<parallel>], iteration_bounds = array<i64: 2>, scalar_prefetch = 0 : i64, scratch_operands = 0 : i64, tpu.core_type = #tpu.core_type<tc>, window_params = [{transform_indices = @transform_0, window_bounds = array<i64: 1, 8, 32>}, {pipeline_mode = #tpu.pipeline_mode<synchronous>, transform_indices = @transform_1, window_bounds = array<i64: 32, 96>}, {pipeline_mode = #tpu.pipeline_mode<synchronous>, transform_indices = @transform_2, window_bounds = array<i64: 32, 32>}, {pipeline_mode = #tpu.pipeline_mode<synchronous>, transform_indices = @transform_3, window_bounds = array<i64: 3, 32>}, {transform_indices = @transform_4, window_bounds = array<i64: 1, 8, 32>}]} {
    %c0 = arith.constant 0 : index
    %c0_0 = arith.constant 0 : index
    %c0_1 = arith.constant 0 : index
    %0 = vector.load %arg1[%c0, %c0_0, %c0_1] : memref<1x8x32xf32, #tpu.memory_space<vmem>>, vector<1x8x32xf32>
    %c0_2 = arith.constant 0 : index
    %c0_3 = arith.constant 0 : index
    %1 = vector.load %arg3[%c0_2, %c0_3] : memref<32x32xf32, #tpu.memory_space<vmem>>, vector<32x32xf32>
    %c0_4 = arith.constant 0 : index
    %c0_5 = arith.constant 0 : index
    %2 = vector.load %arg4[%c0_4, %c0_5] : memref<3x32xf32, #tpu.memory_space<vmem>>, vector<1x32xf32>
    %c1 = arith.constant 1 : index
    %c0_6 = arith.constant 0 : index
    %3 = vector.load %arg4[%c1, %c0_6] : memref<3x32xf32, #tpu.memory_space<vmem>>, vector<1x32xf32>
    %c2 = arith.constant 2 : index
    %c0_7 = arith.constant 0 : index
    %4 = vector.load %arg4[%c2, %c0_7] : memref<3x32xf32, #tpu.memory_space<vmem>>, vector<1x32xf32>
    %c0_8 = arith.constant 0 : index
    %c0_9 = arith.constant 0 : index
    %5 = vector.load %arg2[%c0_8, %c0_9] : memref<32x96xf32, #tpu.memory_space<vmem>>, vector<32x96xf32>
    %cst = arith.constant dense<0.000000e+00> : vector<1x8x96xf32>
    %6 = tpu.matmul %0, %5, %cst {dimension_numbers = #tpu.dot_dimension_numbers<[2], [0], [0, 1], [1], [0, 0, 0, 1, 1, 1], [], []>} : vector<1x8x32xf32>, vector<32x96xf32>, vector<1x8x96xf32> -> vector<1x8x96xf32>
    %7 = vector.shape_cast %2 : vector<1x32xf32> to vector<1x1x32xf32>
    %8 = vector.broadcast %7 : vector<1x1x32xf32> to vector<1x8x32xf32>
    %9 = arith.addf %0, %8 : vector<1x8x32xf32>
    %10 = vector.extract_strided_slice %6 {offsets = [0, 0, 0], sizes = [1, 8, 16], strides = [1, 1, 1]} : vector<1x8x96xf32> to vector<1x8x16xf32>
    %11 = vector.extract_strided_slice %6 {offsets = [0, 0, 32], sizes = [1, 8, 16], strides = [1, 1, 1]} : vector<1x8x96xf32> to vector<1x8x16xf32>
    %12 = vector.extract_strided_slice %6 {offsets = [0, 0, 64], sizes = [1, 8, 16], strides = [1, 1, 1]} : vector<1x8x96xf32> to vector<1x8x16xf32>
    %cst_10 = arith.constant dense<0.000000e+00> : vector<1x8x8xf32>
    %13 = tpu.matmul %10, %11, %cst_10 {dimension_numbers = #tpu.dot_dimension_numbers<[2], [2], [1], [1], [0, 0, 0, 1, 1, 1], [0], [0]>} : vector<1x8x16xf32>, vector<1x8x16xf32>, vector<1x8x8xf32> -> vector<1x8x8xf32>
    %cst_11 = arith.constant dense<0xFF800000> : vector<1x8xf32>
    %14 = vector.multi_reduction <maximumf>, %13, %cst_11 [2] : vector<1x8x8xf32> to vector<1x8xf32>
    %15 = vector.shape_cast %14 : vector<1x8xf32> to vector<1x8x1xf32>
    %16 = vector.broadcast %15 : vector<1x8x1xf32> to vector<1x8x8xf32>
    %17 = arith.subf %13, %16 : vector<1x8x8xf32>
    %18 = math.exp %17 : vector<1x8x8xf32>
    %cst_12 = arith.constant dense<0.000000e+00> : vector<1x8xf32>
    %19 = vector.multi_reduction <add>, %18, %cst_12 [2] : vector<1x8x8xf32> to vector<1x8xf32>
    %20 = vector.shape_cast %19 : vector<1x8xf32> to vector<1x8x1xf32>
    %21 = tpu.reciprocal %20 {approx = true} : vector<1x8x1xf32> -> vector<1x8x1xf32>
    %22 = vector.broadcast %21 : vector<1x8x1xf32> to vector<1x8x8xf32>
    %23 = arith.mulf %18, %22 : vector<1x8x8xf32>
    %cst_13 = arith.constant dense<0.000000e+00> : vector<1x8x16xf32>
    %24 = tpu.matmul %23, %12, %cst_13 {dimension_numbers = #tpu.dot_dimension_numbers<[2], [1], [1], [2], [0, 0, 0, 1, 1, 2], [0], [0]>} : vector<1x8x8xf32>, vector<1x8x16xf32>, vector<1x8x16xf32> -> vector<1x8x16xf32>
    %25 = vector.extract_strided_slice %1 {offsets = [0, 0], sizes = [16, 32], strides = [1, 1]} : vector<32x32xf32> to vector<16x32xf32>
    %cst_14 = arith.constant dense<0.000000e+00> : vector<1x8x32xf32>
    %26 = tpu.matmul %24, %25, %cst_14 {dimension_numbers = #tpu.dot_dimension_numbers<[2], [0], [0, 1], [1], [0, 0, 0, 1, 1, 1], [], []>} : vector<1x8x16xf32>, vector<16x32xf32>, vector<1x8x32xf32> -> vector<1x8x32xf32>
    %27 = arith.addf %9, %26 : vector<1x8x32xf32>
    %28 = vector.extract_strided_slice %6 {offsets = [0, 0, 16], sizes = [1, 8, 16], strides = [1, 1, 1]} : vector<1x8x96xf32> to vector<1x8x16xf32>
    %29 = vector.extract_strided_slice %6 {offsets = [0, 0, 48], sizes = [1, 8, 16], strides = [1, 1, 1]} : vector<1x8x96xf32> to vector<1x8x16xf32>
    %30 = vector.extract_strided_slice %6 {offsets = [0, 0, 80], sizes = [1, 8, 16], strides = [1, 1, 1]} : vector<1x8x96xf32> to vector<1x8x16xf32>
    %cst_15 = arith.constant dense<0.000000e+00> : vector<1x8x8xf32>
    %31 = tpu.matmul %28, %29, %cst_15 {dimension_numbers = #tpu.dot_dimension_numbers<[2], [2], [1], [1], [0, 0, 0, 1, 1, 1], [0], [0]>} : vector<1x8x16xf32>, vector<1x8x16xf32>, vector<1x8x8xf32> -> vector<1x8x8xf32>
    %cst_16 = arith.constant dense<0xFF800000> : vector<1x8xf32>
    %32 = vector.multi_reduction <maximumf>, %31, %cst_16 [2] : vector<1x8x8xf32> to vector<1x8xf32>
    %33 = vector.shape_cast %32 : vector<1x8xf32> to vector<1x8x1xf32>
    %34 = vector.broadcast %33 : vector<1x8x1xf32> to vector<1x8x8xf32>
    %35 = arith.subf %31, %34 : vector<1x8x8xf32>
    %36 = math.exp %35 : vector<1x8x8xf32>
    %cst_17 = arith.constant dense<0.000000e+00> : vector<1x8xf32>
    %37 = vector.multi_reduction <add>, %36, %cst_17 [2] : vector<1x8x8xf32> to vector<1x8xf32>
    %38 = vector.shape_cast %37 : vector<1x8xf32> to vector<1x8x1xf32>
    %39 = tpu.reciprocal %38 {approx = true} : vector<1x8x1xf32> -> vector<1x8x1xf32>
    %40 = vector.broadcast %39 : vector<1x8x1xf32> to vector<1x8x8xf32>
    %41 = arith.mulf %36, %40 : vector<1x8x8xf32>
    %cst_18 = arith.constant dense<0.000000e+00> : vector<1x8x16xf32>
    %42 = tpu.matmul %41, %30, %cst_18 {dimension_numbers = #tpu.dot_dimension_numbers<[2], [1], [1], [2], [0, 0, 0, 1, 1, 2], [0], [0]>} : vector<1x8x8xf32>, vector<1x8x16xf32>, vector<1x8x16xf32> -> vector<1x8x16xf32>
    %43 = vector.extract_strided_slice %1 {offsets = [16, 0], sizes = [16, 32], strides = [1, 1]} : vector<32x32xf32> to vector<16x32xf32>
    %cst_19 = arith.constant dense<0.000000e+00> : vector<1x8x32xf32>
    %44 = tpu.matmul %42, %43, %cst_19 {dimension_numbers = #tpu.dot_dimension_numbers<[2], [0], [0, 1], [1], [0, 0, 0, 1, 1, 1], [], []>} : vector<1x8x16xf32>, vector<16x32xf32>, vector<1x8x32xf32> -> vector<1x8x32xf32>
    %45 = arith.addf %27, %44 : vector<1x8x32xf32>
    %cst_20 = arith.constant dense<0.000000e+00> : vector<1x8xf32>
    %46 = vector.multi_reduction <add>, %45, %cst_20 [2] : vector<1x8x32xf32> to vector<1x8xf32>
    %47 = vector.shape_cast %46 : vector<1x8xf32> to vector<1x8x1xf32>
    %cst_21 = arith.constant 3.200000e+01 : f32
    %48 = vector.broadcast %cst_21 : f32 to vector<1x8x1xf32>
    %49 = arith.divf %47, %48 : vector<1x8x1xf32>
    %50 = vector.broadcast %49 : vector<1x8x1xf32> to vector<1x8x32xf32>
    %51 = arith.subf %45, %50 : vector<1x8x32xf32>
    %52 = arith.mulf %51, %51 : vector<1x8x32xf32>
    %cst_22 = arith.constant dense<0.000000e+00> : vector<1x8xf32>
    %53 = vector.multi_reduction <add>, %52, %cst_22 [2] : vector<1x8x32xf32> to vector<1x8xf32>
    %54 = vector.shape_cast %53 : vector<1x8xf32> to vector<1x8x1xf32>
    %cst_23 = arith.constant 3.200000e+01 : f32
    %55 = vector.broadcast %cst_23 : f32 to vector<1x8x1xf32>
    %56 = arith.divf %54, %55 : vector<1x8x1xf32>
    %cst_24 = arith.constant 9.99999974E-6 : f32
    %57 = vector.broadcast %cst_24 : f32 to vector<1x8x1xf32>
    %58 = arith.addf %56, %57 : vector<1x8x1xf32>
    %59 = math.rsqrt %58 : vector<1x8x1xf32>
    %60 = vector.broadcast %59 : vector<1x8x1xf32> to vector<1x8x32xf32>
    %61 = arith.mulf %51, %60 : vector<1x8x32xf32>
    %62 = vector.shape_cast %3 : vector<1x32xf32> to vector<1x1x32xf32>
    %63 = vector.broadcast %62 : vector<1x1x32xf32> to vector<1x8x32xf32>
    %64 = arith.mulf %61, %63 : vector<1x8x32xf32>
    %65 = vector.shape_cast %4 : vector<1x32xf32> to vector<1x1x32xf32>
    %66 = vector.broadcast %65 : vector<1x1x32xf32> to vector<1x8x32xf32>
    %67 = arith.addf %64, %66 : vector<1x8x32xf32>
    %c0_25 = arith.constant 0 : index
    %c0_26 = arith.constant 0 : index
    %c0_27 = arith.constant 0 : index
    %68 = vector.load %arg5[%c0_25, %c0_26, %c0_27] : memref<1x8x32xf32, #tpu.memory_space<vmem>>, vector<1x8x32xf32>
    tpu.vector_store %arg5[%c0_25, %c0_26, %c0_27], %67 {strides = array<i32>} : memref<1x8x32xf32, #tpu.memory_space<vmem>>, vector<1x8x32xf32>,
    return
  }
  func.func @transform_0(%arg0: i32) -> (i32, i32, i32) {
    %c0_i32 = arith.constant 0 : i32
    %c0_i32_0 = arith.constant 0 : i32
    %c0_i32_1 = arith.constant 0 : i32
    return %arg0, %c0_i32, %c0_i32_0 : i32, i32, i32
  }
  func.func @transform_1(%arg0: i32) -> (i32, i32) {
    %c0_i32 = arith.constant 0 : i32
    %c0_i32_0 = arith.constant 0 : i32
    %c0_i32_1 = arith.constant 0 : i32
    return %c0_i32, %c0_i32_0 : i32, i32
  }
  func.func @transform_2(%arg0: i32) -> (i32, i32) {
    %c0_i32 = arith.constant 0 : i32
    %c0_i32_0 = arith.constant 0 : i32
    %c0_i32_1 = arith.constant 0 : i32
    return %c0_i32, %c0_i32_0 : i32, i32
  }
  func.func @transform_3(%arg0: i32) -> (i32, i32) {
    %c0_i32 = arith.constant 0 : i32
    %c0_i32_0 = arith.constant 0 : i32
    %c0_i32_1 = arith.constant 0 : i32
    return %c0_i32, %c0_i32_0 : i32, i32
  }
  func.func @transform_4(%arg0: i32) -> (i32, i32, i32) {
    %c0_i32 = arith.constant 0 : i32
    %c0_i32_0 = arith.constant 0 : i32
    %c0_i32_1 = arith.constant 0 : i32
    return %arg0, %c0_i32, %c0_i32_0 : i32, i32, i32
  }
}

</mosaic_0001>

<llo_original>
// kernel: encoder_layer.1
$region0: #{encoder_layer.1}
  #allocation0 [shape = 'u32[]', space=smem, size = 0x4, offset = 0x4, fixed_abs, tag = 'smem constant byte address 0x4 - core index']
  #allocation1 [shape = 'u32[144,128]{1,0:T(1,128)}', space=vmem, size = 0x12000, scoped, tag = 'internal scratch']
  %s0 = inlined_call_operand.hbm [shape: f32[2,8,32], index: 0, kind: input, shape index: {}]
  %s1 = inlined_call_operand.hbm [shape: f32[32,96], index: 1, kind: input, shape index: {}]
  %s2 = inlined_call_operand.hbm [shape: f32[32,32], index: 2, kind: input, shape index: {}]
  %s3 = inlined_call_operand.vmem [shape: f32[3,32], index: 3, kind: input, shape index: {}]
  %s4 = inlined_call_operand.hbm [shape: f32[2,8,32], index: 4, kind: output, shape index: {}]
  %s5 = sld [smem:[#allocation0]]
  $region61: #{encoder_layer.1} parent=0
    _
  %s7 = ssub.s32 1, %s5
  %s8 = scalar_select 0, %s7, %s5
  $region1: #{encoder_layer.1} parent=0
    #allocation2 [shape = 'u8[8192]{0}', space=vmem, size = 0x2000, scoped, tag = 'input window, operand 0']
    #allocation3 [shape = 's32[2]{0}', space=sflag, size = 0x8, scoped, tag = 'scoped memory for encoder_layer.1']
    #allocation4 [shape = 's32[2]{0}', space=sflag, size = 0x8, scoped, tag = 'scoped memory for encoder_layer.1']
    #allocation5 [shape = 'u8[16384]{0}', space=vmem, size = 0x4000, scoped, tag = 'input window, operand 1, single buffered']
    #allocation6 [shape = 's32[1]{0}', space=sflag, size = 0x4, scoped, tag = 'scoped memory for encoder_layer.1']
    #allocation7 [shape = 'u8[16384]{0}', space=vmem, size = 0x4000, scoped, tag = 'input window, operand 2, single buffered']
    #allocation8 [shape = 'u8[8192]{0}', space=vmem, size = 0x2000, scoped, tag = 'output window, operand 0']
    %9 = vsyncpa [#allocation3], 0
    %s10 = scalar_lea.sflag [#allocation3], 1
    %11 = vsyncpa %s10, 0
    %12 = vsyncpa [#allocation6], 0
    %13 = vsyncpa [#allocation4], 0
    %s14 = scalar_lea.sflag [#allocation4], 1
    %15 = vsyncpa %s14, 0
    loop: start=0, step=1, limit=4
    $region2: #{encoder_layer.1} parent=1 // loop_pre_header
      _
    $region3: #{encoder_layer.1} parent=1 // loop_header
      %s17 = sphi 0, %s21
      %p18 = scmp.ge.s32.totalorder %s17, 4
      %s27 = sphi 0, %s29
      %s30 = sphi 0, %s27
      %s31 = sphi 0, %s30
      %s47 = sphi 0, %s31
      %s51 = sphi 0, %s51
      %s53 = sphi 0, %s51
      %s54 = sphi 0, %s53
      %s68 = sphi 0, %s54
      %s72 = sphi 0, %s72
      %s74 = sphi 0, %s72
      %s75 = sphi 0, %s74
      %s89 = sphi 0, %s75
      %s93 = sphi 0, %s93
      %s95 = sphi 0, %s93
      %s96 = sphi 0, %s95
      %s110 = sphi 0, %s96
      %s116 = sphi 0, %s118
      %s119 = sphi 0, %s116
      %s120 = sphi 0, %s119
      %s136 = sphi 0, %s120
    $region4: #{encoder_layer.1} parent=1 // loop_header_branch
      %20 = sbr.rel (%p18) target = $region8
    $region5: #{encoder_layer.1} parent=1 // loop_body
      %s22 = ssub.s32 %s17, 1
      %s23 = ssub.s32 %s17, 2
      %s24 = sadd.s32 %s17, 1
      %s25 = ssub.s32 %s17, %s24
      %p26 = scmp.eq.s32.totalorder %s25, 0
      %s28 = sadd.s32 %s27, 1
      %s29 = scalar_select %p26, %s27, %s28
      %p32 = pneg %p26
      %p33 = scmp.eq.s32.totalorder %s17, 1
      %p34 = por %p32, %p33
      %p35 = scmp.ne.s32.totalorder %s27, %s30
      %p36 = scmp.eq.s32.totalorder %s17, 0
      %p37 = por %p35, %p36
      %p38 = scmp.ne.s32.totalorder %s27, %s30
      %p39 = scmp.eq.s32.totalorder %s22, 1
      %p40 = por %p38, %p39
      %p41 = scmp.ne.s32.totalorder %s30, %s31
      %p42 = scmp.eq.s32.totalorder %s22, 0
      %p43 = por %p41, %p42
      %p44 = scmp.ne.s32.totalorder %s30, %s31
      %p45 = scmp.eq.s32.totalorder %s23, 1
      %p46 = por %p44, %p45
      %p48 = scmp.ne.s32.totalorder %s31, %s47
      %p49 = scmp.eq.s32.totalorder %s23, 0
      %p50 = por %p48, %p49
      %s52 = sadd.s32 %s51, 1
      %p55 = scmp.eq.s32.totalorder %s17, 1
      %p56 = scmp.ne.s32.totalorder %s51, %s53
      %p57 = scmp.eq.s32.totalorder %s17, 0
      %p58 = por %p56, %p57
      %p59 = scmp.ne.s32.totalorder %s51, %s53
      %p60 = scmp.eq.s32.totalorder %s22, 1
      %p61 = por %p59, %p60
      %p62 = scmp.ne.s32.totalorder %s53, %s54
      %p63 = scmp.eq.s32.totalorder %s22, 0
      %p64 = por %p62, %p63
      %p65 = scmp.ne.s32.totalorder %s53, %s54
      %p66 = scmp.eq.s32.totalorder %s23, 1
      %p67 = por %p65, %p66
      %p69 = scmp.ne.s32.totalorder %s54, %s68
      %p70 = scmp.eq.s32.totalorder %s23, 0
      %p71 = por %p69, %p70
      %s73 = sadd.s32 %s72, 1
      %p76 = scmp.eq.s32.totalorder %s17, 1
      %p77 = scmp.ne.s32.totalorder %s72, %s74
      %p78 = scmp.eq.s32.totalorder %s17, 0
      %p79 = por %p77, %p78
      %p80 = scmp.ne.s32.totalorder %s72, %s74
      %p81 = scmp.eq.s32.totalorder %s22, 1
      %p82 = por %p80, %p81
      %p83 = scmp.ne.s32.totalorder %s74, %s75
      %p84 = scmp.eq.s32.totalorder %s22, 0
      %p85 = por %p83, %p84
      %p86 = scmp.ne.s32.totalorder %s74, %s75
      %p87 = scmp.eq.s32.totalorder %s23, 1
      %p88 = por %p86, %p87
      %p90 = scmp.ne.s32.totalorder %s75, %s89
      %p91 = scmp.eq.s32.totalorder %s23, 0
      %p92 = por %p90, %p91
      %s94 = sadd.s32 %s93, 1
      %p97 = scmp.eq.s32.totalorder %s17, 1
      %p98 = scmp.ne.s32.totalorder %s93, %s95
      %p99 = scmp.eq.s32.totalorder %s17, 0
      %p100 = por %p98, %p99
      %p101 = scmp.ne.s32.totalorder %s93, %s95
      %p102 = scmp.eq.s32.totalorder %s22, 1
      %p103 = por %p101, %p102
      %p104 = scmp.ne.s32.totalorder %s95, %s96
      %p105 = scmp.eq.s32.totalorder %s22, 0
      %p106 = por %p104, %p105
      %p107 = scmp.ne.s32.totalorder %s95, %s96
      %p108 = scmp.eq.s32.totalorder %s23, 1
      %p109 = por %p107, %p108
      %p111 = scmp.ne.s32.totalorder %s96, %s110
      %p112 = scmp.eq.s32.totalorder %s23, 0
      %p113 = por %p111, %p112
      %s114 = ssub.s32 %s17, %s24
      %p115 = scmp.eq.s32.totalorder %s114, 0
      %s117 = sadd.s32 %s116, 1
      %s118 = scalar_select %p115, %s116, %s117
      %p121 = pneg %p115
      %p122 = scmp.eq.s32.totalorder %s17, 1
      %p123 = por %p121, %p122
      %p124 = scmp.ne.s32.totalorder %s116, %s119
      %p125 = scmp.eq.s32.totalorder %s17, 0
      %p126 = por %p124, %p125
      %p127 = scmp.ne.s32.totalorder %s116, %s119
      %p128 = scmp.eq.s32.totalorder %s22, 1
      %p129 = por %p127, %p128
      %p130 = scmp.ne.s32.totalorder %s119, %s120
      %p131 = scmp.eq.s32.totalorder %s22, 0
      %p132 = por %p130, %p131
      %p133 = scmp.ne.s32.totalorder %s119, %s120
      %p134 = scmp.eq.s32.totalorder %s23, 1
      %p135 = por %p133, %p134
      %p137 = scmp.ne.s32.totalorder %s120, %s136
      %p138 = scmp.eq.s32.totalorder %s23, 0
      %p139 = por %p137, %p138
      %p140 = scmp.le.s32.totalorder 1, %s17
      %p141 = scmp.lt.s32.totalorder %s17, 3
      %p142 = pnand %p140, %p141
      %p143 = pneg %p142
      // Predicated region
      $region9: #{encoder_layer.1} parent=5 // pred_check
        _
      $region10: #{encoder_layer.1} parent=5 // pred_check_branch
        %145 = sbr.rel (%p142) target = $region12
      $region11: #{encoder_layer.1} parent=5 // pred_region
        %s146 = ssub.s32 %s17, 1
        // Predicated region
        $region13: #{encoder_layer.1} parent=11 // pred_check
          %p147 = pneg %p64
        $region14: #{encoder_layer.1} parent=11 // pred_check_branch
          %149 = sbr.rel (%p147) target = $region16
        $region15: #{encoder_layer.1} parent=11 // pred_region
          %s151 = ssub.s32 512, 512
          %152 = vsyncadd [#allocation6], %s151
          %s153 = sshll.u32 [#allocation5], 4
          %s154 = int_to_ptr.vmem [resolvable:$true] %s153
          %159 = dma.hbm_to_vmem [thread:$0]  %s1, 512, %s154, [#allocation6], 128, 128, 8
        $region16: #{encoder_layer.1} parent=11 // pred_fallthru
          _
        // Predicated region
        $region17: #{encoder_layer.1} parent=11 // pred_check
          %p160 = pneg %p85
        $region18: #{encoder_layer.1} parent=11 // pred_check_branch
          %162 = sbr.rel (%p160) target = $region20
        $region19: #{encoder_layer.1} parent=11 // pred_region
          %s164 = ssub.s32 512, 512
          %165 = vsyncadd [#allocation6], %s164
          %s166 = sshll.u32 [#allocation7], 4
          %s167 = int_to_ptr.vmem [resolvable:$true] %s166
          %172 = dma.hbm_to_vmem [thread:$0]  %s2, 512, %s167, [#allocation6], 128, 128, 8
        $region20: #{encoder_layer.1} parent=11 // pred_fallthru
          _
        // Predicated region
        $region21: #{encoder_layer.1} parent=11 // pred_check
          %p173 = pneg %p106
        $region22: #{encoder_layer.1} parent=11 // pred_check_branch
          %175 = sbr.rel (%p173) target = $region24
        $region23: #{encoder_layer.1} parent=11 // pred_region
          _
        $region24: #{encoder_layer.1} parent=11 // pred_fallthru
          _
      $region12: #{encoder_layer.1} parent=5 // pred_fallthru
        _
      %p176 = scmp.lt.s32.totalorder %s17, 2
      // Predicated region
      $region25: #{encoder_layer.1} parent=5 // pred_check
        %p177 = pneg %p176
      $region26: #{encoder_layer.1} parent=5 // pred_check_branch
        %179 = sbr.rel (%p177) target = $region28
      $region27: #{encoder_layer.1} parent=5 // pred_region
        // Predicated region
        $region29: #{encoder_layer.1} parent=27 // pred_check
          %p180 = pneg %p37
        $region30: #{encoder_layer.1} parent=27 // pred_check_branch
          %182 = sbr.rel (%p180) target = $region32
        $region31: #{encoder_layer.1} parent=27 // pred_region
          %s183 = sand.u32 %s27, 1
          %s184 = scalar_lea.sflag [#allocation3], %s183
          %s185 = sand.u32 %s27, 1
          %s186 = smul.addr %s185, 8
          %s187 = scalar_lea.vmem [#allocation2], %s186
          %s189 = ssub.s32 128, 128
          %190 = vsyncadd %s184, %s189
          %s191 = smul.addr %s17, 128
          %s192 = scalar_lea.hbm %s0, %s191
          %s194 = sshll.u32 %s187, 4
          %s195 = int_to_ptr.vmem [resolvable:$true] %s194
          %197 = dma.hbm_to_vmem [thread:$0]  %s192, 128, %s195, %s184
        $region32: #{encoder_layer.1} parent=27 // pred_fallthru
          _
      $region28: #{encoder_layer.1} parent=5 // pred_fallthru
        _
      %p198 = scmp.le.s32.totalorder 1, %s17
      %p199 = scmp.lt.s32.totalorder %s17, 3
      %p200 = pnand %p198, %p199
      %p201 = pneg %p200
      // Predicated region
      $region33: #{encoder_layer.1} parent=5 // pred_check
        _
      $region34: #{encoder_layer.1} parent=5 // pred_check_branch
        %203 = sbr.rel (%p200) target = $region36
      $region35: #{encoder_layer.1} parent=5 // pred_region
        %s204 = ssub.s32 %s17, 1
        %s205 = sand.u32 %s30, 1
        %s206 = scalar_lea.sflag [#allocation3], %s205
        %s207 = sand.u32 %s30, 1
        %s208 = smul.addr %s207, 8
        %s209 = scalar_lea.vmem [#allocation2], %s208
        // Predicated region
        $region37: #{encoder_layer.1} parent=35 // pred_check
          %p210 = pneg %p43
        $region38: #{encoder_layer.1} parent=35 // pred_check_branch
          %212 = sbr.rel (%p210) target = $region40
        $region39: #{encoder_layer.1} parent=35 // pred_region
          %213 = dma.done %s206, 128
        $region40: #{encoder_layer.1} parent=35 // pred_fallthru
          _
        // Predicated region
        $region41: #{encoder_layer.1} parent=35 // pred_check
          %p214 = pneg %p64
        $region42: #{encoder_layer.1} parent=35 // pred_check_branch
          %216 = sbr.rel (%p214) target = $region44
        $region43: #{encoder_layer.1} parent=35 // pred_region
          %217 = dma.done [#allocation6], 512
        $region44: #{encoder_layer.1} parent=35 // pred_fallthru
          _
        // Predicated region
        $region45: #{encoder_layer.1} parent=35 // pred_check
          %p218 = pneg %p85
        $region46: #{encoder_layer.1} parent=35 // pred_check_branch
          %220 = sbr.rel (%p218) target = $region48
        $region47: #{encoder_layer.1} parent=35 // pred_region
          %221 = dma.done [#allocation6], 512
        $region48: #{encoder_layer.1} parent=35 // pred_fallthru
          _
        %s222 = sand.u32 %s30, 1
        %s223 = scalar_lea.sflag [#allocation3], %s222
        %s224 = sand.u32 %s30, 1
        %s225 = smul.addr %s224, 8
        %s226 = scalar_lea.vmem [#allocation2], %s225
        %p227 = pneg %p43
        %p228 = pneg %p40
        %p229 = pneg %p64
        %p230 = pneg %p61
        %p231 = pneg %p85
        %p232 = pneg %p82
        %p233 = pneg %p106
        %p234 = pneg %p103
        %p235 = pneg %p132
        %p236 = pneg %p129
        %s237 = sand.u32 %s119, 1
        %s238 = scalar_lea.sflag [#allocation4], %s237
        %s239 = sand.u32 %s119, 1
        %s240 = smul.addr %s239, 8
        %s241 = scalar_lea.vmem [#allocation8], %s240
        %v242 = vld [vmem:[%s209] sm:$0xff]
        %v243 = vld [vmem:[#allocation7] sm:$0xff]
        %v244 = vld [vmem:[#allocation7 + $0x8] sm:$0xff]
        %v245 = vld [vmem:[#allocation7 + $0x10] sm:$0xff]
        %v246 = vld [vmem:[#allocation7 + $0x18] sm:$0xff]
        %v247 = vld [vmem:[%s3] sm:$0x1]
        %v248 = vld [vmem:[%s3 + $0x1] sm:$0x1]
        %v249 = vld [vmem:[%s3 + $0x2] sm:$0x1]
        %v250 = vld [vmem:[#allocation5] sm:$0xff]
        %v251 = vld [vmem:[#allocation5 + $0x8] sm:$0xff]
        %v252 = vld [vmem:[#allocation5 + $0x10] sm:$0xff]
        %v253 = vld [vmem:[#allocation5 + $0x18] sm:$0xff]
        %vm254 = vcmask 261120
        %v256 = vsel %vm254, %v242, 0
        %258 = vmatprep.subr.mxu0 0.0
        %259 = vmatpush1.msra.mxu0 %v250
        %260 = vmatprep.subr.mxu0 0.0
        %261 = vmatpush1.msra.mxu0 %v251
        %262 = vmatprep.subr.mxu0 0.0
        %263 = vmatpush1.msra.mxu0 %v252
        %264 = vmatprep.subr.mxu0 0.0
        %265 = vmatpush1.msra.mxu0 %v253
        %266 = vmatprep.subr.mxu0 0.0
        %267 = vmatpush1.msra.mxu0 0.0
        %268 = vmatprep.subr.mxu0 0.0
        %269 = vmatpush1.msra.mxu0 0.0
        %270 = vmatprep.subr.mxu0 0.0
        %271 = vmatpush1.msra.mxu0 0.0
        %272 = vmatprep.subr.mxu0 0.0
        %273 = vmatpush1.msra.mxu0 0.0
        %274 = vmatprep.subr.mxu0 0.0
        %275 = vmatpush1.msra.mxu0 0.0
        %276 = vmatprep.subr.mxu0 0.0
        %277 = vmatpush1.msra.mxu0 0.0
        %278 = vmatprep.subr.mxu0 0.0
        %279 = vmatpush1.msra.mxu0 0.0
        %280 = vmatprep.subr.mxu0 0.0
        %281 = vmatpush1.msra.mxu0 0.0
        %282 = vmatprep.subr.mxu0 0.0
        %283 = vmatpush1.msra.mxu0 0.0
        %284 = vmatprep.subr.mxu0 0.0
        %285 = vmatpush1.msra.mxu0 0.0
        %286 = vmatprep.subr.mxu0 0.0
        %287 = vmatpush1.msra.mxu0 0.0
        %288 = vmatprep.subr.mxu0 0.0
        %289 = vmatpush1.msra.mxu0 0.0
        %290 = vmatprep.subr.mxu0 0.0
        %291 = vmatpush1.msra.mxu0 0.0
        %292 = vmatprep.subr.mxu0 0.0
        %293 = vmatpush1.msra.mxu0 0.0
        %294 = vmatprep.subr.mxu0 0.0
        %295 = vmatpush1.msra.mxu0 0.0
        %296 = vmatprep.subr.mxu0 0.0
        %297 = vmatpush1.msra.mxu0 0.0
        %298 = vmatprep.subr.mxu0 0.0
        %299 = vmatpush1.msra.mxu0 0.0
        %300 = vmatprep.subr.mxu0 0.0
        %301 = vmatpush1.msra.mxu0 0.0
        %302 = vmatprep.subr.mxu0 0.0
        %303 = vmatpush1.msra.mxu0 0.0
        %304 = vmatprep.subr.mxu0 0.0
        %305 = vmatpush1.msra.mxu0 0.0
        %306 = vmatprep.subr.mxu0 0.0
        %307 = vmatpush1.msra.mxu0 0.0
        %308 = vmatprep.subr.mxu0 0.0
        %309 = vmatpush1.msra.mxu0 0.0
        %310 = vmatprep.subr.mxu0 0.0
        %311 = vmatpush1.msra.mxu0 0.0
        %312 = vmatprep.subr.mxu0 0.0
        %313 = vmatpush1.msra.mxu0 0.0
        %314 = vmatprep.subr.mxu0 0.0
        %315 = vmatpush1.msra.mxu0 0.0
        %316 = vmatprep.subr.mxu0 0.0
        %317 = vmatpush1.msra.mxu0 0.0
        %318 = vmatprep.subr.mxu0 0.0
        %319 = vmatpush1.msra.mxu0 0.0
        %320 = vmatprep.subr.mxu0 0.0
        %321 = vmatpush1.msra.mxu0 0.0
        %322 = vmatprep.mubr.f32.mxu0 0.0
        %323 = vmatmul.mubr.f32.gmra.mrb[0].mxu0 %v256
        %v324 = vpop.f32.mrb[0].mxu0
        %v325 = vadd.f32 0.0, %v324
        %v326 = vpop.f32.mrb[0].mxu0
        %327 = vdwg.mxu0
        %v328 = vlaneseq
        %v329 = vshrl.u32 %v328, 7
        %v330 = vsub.s32 0, %v329
        %v331 = vrot.slane %v247, %v330
        %v332 = vadd.f32 %v242, %v331
        %334 = vrot.lane.b32.xlu0 %v325, 96
        %v335 = vpop.permute.xlu0 %334
        %vm336 = vcmask 130048
        %v337 = vsel %vm336, %v325, 0
        %v339 = vsel %vm336, %v335, 0
        %341 = vmatprep.subr.mxu0 0.0
        %342 = vmatpush1.xpose.msra.mxu0 %v339
        %343 = vmatprep.subr.mxu0 0.0
        %344 = vmatpush1.xpose.msra.mxu0 0.0
        %345 = vmatprep.subr.mxu0 0.0
        %346 = vmatpush1.xpose.msra.mxu0 0.0
        %347 = vmatprep.subr.mxu0 0.0
        %348 = vmatpush1.xpose.msra.mxu0 0.0
        %349 = vmatprep.subr.mxu0 0.0
        %350 = vmatpush1.xpose.msra.mxu0 0.0
        %351 = vmatprep.subr.mxu0 0.0
        %352 = vmatpush1.xpose.msra.mxu0 0.0
        %353 = vmatprep.subr.mxu0 0.0
        %354 = vmatpush1.xpose.msra.mxu0 0.0
        %355 = vmatprep.subr.mxu0 0.0
        %356 = vmatpush1.xpose.msra.mxu0 0.0
        %357 = vmatprep.subr.mxu0 0.0
        %358 = vmatpush1.xpose.msra.mxu0 0.0
        %359 = vmatprep.subr.mxu0 0.0
        %360 = vmatpush1.xpose.msra.mxu0 0.0
        %361 = vmatprep.subr.mxu0 0.0
        %362 = vmatpush1.xpose.msra.mxu0 0.0
        %363 = vmatprep.subr.mxu0 0.0
        %364 = vmatpush1.xpose.msra.mxu0 0.0
        %365 = vmatprep.subr.mxu0 0.0
        %366 = vmatpush1.xpose.msra.mxu0 0.0
        %367 = vmatprep.subr.mxu0 0.0
        %368 = vmatpush1.xpose.msra.mxu0 0.0
        %369 = vmatprep.subr.mxu0 0.0
        %370 = vmatpush1.xpose.msra.mxu0 0.0
        %371 = vmatprep.subr.mxu0 0.0
        %372 = vmatpush1.xpose.msra.mxu0 0.0
        %373 = vmatprep.subr.mxu0 0.0
        %374 = vmatpush1.xpose.msra.mxu0 0.0
        %375 = vmatprep.subr.mxu0 0.0
        %376 = vmatpush1.xpose.msra.mxu0 0.0
        %377 = vmatprep.subr.mxu0 0.0
        %378 = vmatpush1.xpose.msra.mxu0 0.0
        %379 = vmatprep.subr.mxu0 0.0
        %380 = vmatpush1.xpose.msra.mxu0 0.0
        %381 = vmatprep.subr.mxu0 0.0
        %382 = vmatpush1.xpose.msra.mxu0 0.0
        %383 = vmatprep.subr.mxu0 0.0
        %384 = vmatpush1.xpose.msra.mxu0 0.0
        %385 = vmatprep.subr.mxu0 0.0
        %386 = vmatpush1.xpose.msra.mxu0 0.0
        %387 = vmatprep.subr.mxu0 0.0
        %388 = vmatpush1.xpose.msra.mxu0 0.0
        %389 = vmatprep.subr.mxu0 0.0
        %390 = vmatpush1.xpose.msra.mxu0 0.0
        %391 = vmatprep.subr.mxu0 0.0
        %392 = vmatpush1.xpose.msra.mxu0 0.0
        %393 = vmatprep.subr.mxu0 0.0
        %394 = vmatpush1.xpose.msra.mxu0 0.0
        %395 = vmatprep.subr.mxu0 0.0
        %396 = vmatpush1.xpose.msra.mxu0 0.0
        %397 = vmatprep.subr.mxu0 0.0
        %398 = vmatpush1.xpose.msra.mxu0 0.0
        %399 = vmatprep.subr.mxu0 0.0
        %400 = vmatpush1.xpose.msra.mxu0 0.0
        %401 = vmatprep.subr.mxu0 0.0
        %402 = vmatpush1.xpose.msra.mxu0 0.0
        %403 = vmatprep.subr.mxu0 0.0
        %404 = vmatpush1.xpose.msra.mxu0 0.0
        %405 = vmatprep.mubr.f32.mxu0 0.0
        %406 = vmatmul.mubr.f32.gmra.mrb[0].mxu0 %v337
        %v407 = vpop.f32.mrb[0].mxu0
        %v408 = vadd.f32 0.0, %v407
        %v409 = vpop.f32.mrb[0].mxu0
        %410 = vdwg.mxu0
        %vm411 = vcmask 64512
        %v412 = vsel %vm411, %v408, -inf
        %413 = vmax.xlane.f32.xlu0 %v412
        %v414 = vpop.xlane.xlu0 %413
        %v415 = vsub.f32 %v408, %v414
        %v416 = vmul.f32 %v415, 1.442695
        %v417 = vpow.pop %v416
        %v418 = vsel %vm411, %v417, 0.0
        %419 = vadd.xlane.f32.xlu0 %v418
        %v420 = vpop.xlane.xlu0 %419
        %v421 = vrcp.pop %v420
        %v422 = vmul.f32 %v417, %v421
        %423 = vrot.lane.b32.xlu0 %v325, 64
        %v424 = vpop.permute.xlu0 %423
        %v427 = vsel %vm411, %v422, 0
        %429 = vmatprep.subr.mxu0 0.0
        %430 = vmatpush1.msra.mxu0 %v424
        %431 = vmatprep.subr.mxu0 0.0
        %432 = vmatpush1.msra.mxu0 0.0
        %433 = vmatprep.subr.mxu0 0.0
        %434 = vmatpush1.msra.mxu0 0.0
        %435 = vmatprep.subr.mxu0 0.0
        %436 = vmatpush1.msra.mxu0 0.0
        %437 = vmatprep.subr.mxu0 0.0
        %438 = vmatpush1.msra.mxu0 0.0
        %439 = vmatprep.subr.mxu0 0.0
        %440 = vmatpush1.msra.mxu0 0.0
        %441 = vmatprep.subr.mxu0 0.0
        %442 = vmatpush1.msra.mxu0 0.0
        %443 = vmatprep.subr.mxu0 0.0
        %444 = vmatpush1.msra.mxu0 0.0
        %445 = vmatprep.subr.mxu0 0.0
        %446 = vmatpush1.msra.mxu0 0.0
        %447 = vmatprep.subr.mxu0 0.0
        %448 = vmatpush1.msra.mxu0 0.0
        %449 = vmatprep.subr.mxu0 0.0
        %450 = vmatpush1.msra.mxu0 0.0
        %451 = vmatprep.subr.mxu0 0.0
        %452 = vmatpush1.msra.mxu0 0.0
        %453 = vmatprep.subr.mxu0 0.0
        %454 = vmatpush1.msra.mxu0 0.0
        %455 = vmatprep.subr.mxu0 0.0
        %456 = vmatpush1.msra.mxu0 0.0
        %457 = vmatprep.subr.mxu0 0.0
        %458 = vmatpush1.msra.mxu0 0.0
        %459 = vmatprep.subr.mxu0 0.0
        %460 = vmatpush1.msra.mxu0 0.0
        %461 = vmatprep.subr.mxu0 0.0
        %462 = vmatpush1.msra.mxu0 0.0
        %463 = vmatprep.subr.mxu0 0.0
        %464 = vmatpush1.msra.mxu0 0.0
        %465 = vmatprep.subr.mxu0 0.0
        %466 = vmatpush1.msra.mxu0 0.0
        %467 = vmatprep.subr.mxu0 0.0
        %468 = vmatpush1.msra.mxu0 0.0
        %469 = vmatprep.subr.mxu0 0.0
        %470 = vmatpush1.msra.mxu0 0.0
        %471 = vmatprep.subr.mxu0 0.0
        %472 = vmatpush1.msra.mxu0 0.0
        %473 = vmatprep.subr.mxu0 0.0
        %474 = vmatpush1.msra.mxu0 0.0
        %475 = vmatprep.subr.mxu0 0.0
        %476 = vmatpush1.msra.mxu0 0.0
        %477 = vmatprep.subr.mxu0 0.0
        %478 = vmatpush1.msra.mxu0 0.0
        %479 = vmatprep.subr.mxu0 0.0
        %480 = vmatpush1.msra.mxu0 0.0
        %481 = vmatprep.subr.mxu0 0.0
        %482 = vmatpush1.msra.mxu0 0.0
        %483 = vmatprep.subr.mxu0 0.0
        %484 = vmatpush1.msra.mxu0 0.0
        %485 = vmatprep.subr.mxu0 0.0
        %486 = vmatpush1.msra.mxu0 0.0
        %487 = vmatprep.subr.mxu0 0.0
        %488 = vmatpush1.msra.mxu0 0.0
        %489 = vmatprep.subr.mxu0 0.0
        %490 = vmatpush1.msra.mxu0 0.0
        %491 = vmatprep.subr.mxu0 0.0
        %492 = vmatpush1.msra.mxu0 0.0
        %493 = vmatprep.mubr.f32.mxu0 0.0
        %494 = vmatmul.mubr.f32.gmra.mrb[0].mxu0 %v427
        %v495 = vpop.f32.mrb[0].mxu0
        %v496 = vadd.f32 0.0, %v495
        %v497 = vpop.f32.mrb[0].mxu0
        %498 = vdwg.mxu0
        %v500 = vsel %vm336, %v496, 0
        %502 = vmatprep.subr.mxu0 0.0
        %503 = vmatpush1.msra.mxu0 %v243
        %504 = vmatprep.subr.mxu0 0.0
        %505 = vmatpush1.msra.mxu0 %v244
        %506 = vmatprep.subr.mxu0 0.0
        %507 = vmatpush1.msra.mxu0 0.0
        %508 = vmatprep.subr.mxu0 0.0
        %509 = vmatpush1.msra.mxu0 0.0
        %510 = vmatprep.subr.mxu0 0.0
        %511 = vmatpush1.msra.mxu0 0.0
        %512 = vmatprep.subr.mxu0 0.0
        %513 = vmatpush1.msra.mxu0 0.0
        %514 = vmatprep.subr.mxu0 0.0
        %515 = vmatpush1.msra.mxu0 0.0
        %516 = vmatprep.subr.mxu0 0.0
        %517 = vmatpush1.msra.mxu0 0.0
        %518 = vmatprep.subr.mxu0 0.0
        %519 = vmatpush1.msra.mxu0 0.0
        %520 = vmatprep.subr.mxu0 0.0
        %521 = vmatpush1.msra.mxu0 0.0
        %522 = vmatprep.subr.mxu0 0.0
        %523 = vmatpush1.msra.mxu0 0.0
        %524 = vmatprep.subr.mxu0 0.0
        %525 = vmatpush1.msra.mxu0 0.0
        %526 = vmatprep.subr.mxu0 0.0
        %527 = vmatpush1.msra.mxu0 0.0
        %528 = vmatprep.subr.mxu0 0.0
        %529 = vmatpush1.msra.mxu0 0.0
        %530 = vmatprep.subr.mxu0 0.0
        %531 = vmatpush1.msra.mxu0 0.0
        %532 = vmatprep.subr.mxu0 0.0
        %533 = vmatpush1.msra.mxu0 0.0
        %534 = vmatprep.subr.mxu0 0.0
        %535 = vmatpush1.msra.mxu0 0.0
        %536 = vmatprep.subr.mxu0 0.0
        %537 = vmatpush1.msra.mxu0 0.0
        %538 = vmatprep.subr.mxu0 0.0
        %539 = vmatpush1.msra.mxu0 0.0
        %540 = vmatprep.subr.mxu0 0.0
        %541 = vmatpush1.msra.mxu0 0.0
        %542 = vmatprep.subr.mxu0 0.0
        %543 = vmatpush1.msra.mxu0 0.0
        %544 = vmatprep.subr.mxu0 0.0
        %545 = vmatpush1.msra.mxu0 0.0
        %546 = vmatprep.subr.mxu0 0.0
        %547 = vmatpush1.msra.mxu0 0.0
        %548 = vmatprep.subr.mxu0 0.0
        %549 = vmatpush1.msra.mxu0 0.0
        %550 = vmatprep.subr.mxu0 0.0
        %551 = vmatpush1.msra.mxu0 0.0
        %552 = vmatprep.subr.mxu0 0.0
        %553 = vmatpush1.msra.mxu0 0.0
        %554 = vmatprep.subr.mxu0 0.0
        %555 = vmatpush1.msra.mxu0 0.0
        %556 = vmatprep.subr.mxu0 0.0
        %557 = vmatpush1.msra.mxu0 0.0
        %558 = vmatprep.subr.mxu0 0.0
        %559 = vmatpush1.msra.mxu0 0.0
        %560 = vmatprep.subr.mxu0 0.0
        %561 = vmatpush1.msra.mxu0 0.0
        %562 = vmatprep.subr.mxu0 0.0
        %563 = vmatpush1.msra.mxu0 0.0
        %564 = vmatprep.subr.mxu0 0.0
        %565 = vmatpush1.msra.mxu0 0.0
        %566 = vmatprep.mubr.f32.mxu0 0.0
        %567 = vmatmul.mubr.f32.gmra.mrb[0].mxu0 %v500
        %v568 = vpop.f32.mrb[0].mxu0
        %v569 = vadd.f32 0.0, %v568
        %v570 = vpop.f32.mrb[0].mxu0
        %571 = vdwg.mxu0
        %v572 = vadd.f32 %v332, %v569
        %573 = vrot.lane.b32.xlu0 %v325, 112
        %v574 = vpop.permute.xlu0 %573
        %575 = vrot.lane.b32.xlu0 %v325, 80
        %v576 = vpop.permute.xlu0 %575
        %v577 = vsel %vm336, %v574, 0
        %v579 = vsel %vm336, %v576, 0
        %581 = vmatprep.subr.mxu0 0.0
        %582 = vmatpush1.xpose.msra.mxu0 %v579
        %583 = vmatprep.subr.mxu0 0.0
        %584 = vmatpush1.xpose.msra.mxu0 0.0
        %585 = vmatprep.subr.mxu0 0.0
        %586 = vmatpush1.xpose.msra.mxu0 0.0
        %587 = vmatprep.subr.mxu0 0.0
        %588 = vmatpush1.xpose.msra.mxu0 0.0
        %589 = vmatprep.subr.mxu0 0.0
        %590 = vmatpush1.xpose.msra.mxu0 0.0
        %591 = vmatprep.subr.mxu0 0.0
        %592 = vmatpush1.xpose.msra.mxu0 0.0
        %593 = vmatprep.subr.mxu0 0.0
        %594 = vmatpush1.xpose.msra.mxu0 0.0
        %595 = vmatprep.subr.mxu0 0.0
        %596 = vmatpush1.xpose.msra.mxu0 0.0
        %597 = vmatprep.subr.mxu0 0.0
        %598 = vmatpush1.xpose.msra.mxu0 0.0
        %599 = vmatprep.subr.mxu0 0.0
        %600 = vmatpush1.xpose.msra.mxu0 0.0
        %601 = vmatprep.subr.mxu0 0.0
        %602 = vmatpush1.xpose.msra.mxu0 0.0
        %603 = vmatprep.subr.mxu0 0.0
        %604 = vmatpush1.xpose.msra.mxu0 0.0
        %605 = vmatprep.subr.mxu0 0.0
        %606 = vmatpush1.xpose.msra.mxu0 0.0
        %607 = vmatprep.subr.mxu0 0.0
        %608 = vmatpush1.xpose.msra.mxu0 0.0
        %609 = vmatprep.subr.mxu0 0.0
        %610 = vmatpush1.xpose.msra.mxu0 0.0
        %611 = vmatprep.subr.mxu0 0.0
        %612 = vmatpush1.xpose.msra.mxu0 0.0
        %613 = vmatprep.subr.mxu0 0.0
        %614 = vmatpush1.xpose.msra.mxu0 0.0
        %615 = vmatprep.subr.mxu0 0.0
        %616 = vmatpush1.xpose.msra.mxu0 0.0
        %617 = vmatprep.subr.mxu0 0.0
        %618 = vmatpush1.xpose.msra.mxu0 0.0
        %619 = vmatprep.subr.mxu0 0.0
        %620 = vmatpush1.xpose.msra.mxu0 0.0
        %621 = vmatprep.subr.mxu0 0.0
        %622 = vmatpush1.xpose.msra.mxu0 0.0
        %623 = vmatprep.subr.mxu0 0.0
        %624 = vmatpush1.xpose.msra.mxu0 0.0
        %625 = vmatprep.subr.mxu0 0.0
        %626 = vmatpush1.xpose.msra.mxu0 0.0
        %627 = vmatprep.subr.mxu0 0.0
        %628 = vmatpush1.xpose.msra.mxu0 0.0
        %629 = vmatprep.subr.mxu0 0.0
        %630 = vmatpush1.xpose.msra.mxu0 0.0
        %631 = vmatprep.subr.mxu0 0.0
        %632 = vmatpush1.xpose.msra.mxu0 0.0
        %633 = vmatprep.subr.mxu0 0.0
        %634 = vmatpush1.xpose.msra.mxu0 0.0
        %635 = vmatprep.subr.mxu0 0.0
        %636 = vmatpush1.xpose.msra.mxu0 0.0
        %637 = vmatprep.subr.mxu0 0.0
        %638 = vmatpush1.xpose.msra.mxu0 0.0
        %639 = vmatprep.subr.mxu0 0.0
        %640 = vmatpush1.xpose.msra.mxu0 0.0
        %641 = vmatprep.subr.mxu0 0.0
        %642 = vmatpush1.xpose.msra.mxu0 0.0
        %643 = vmatprep.subr.mxu0 0.0
        %644 = vmatpush1.xpose.msra.mxu0 0.0
        %645 = vmatprep.mubr.f32.mxu0 0.0
        %646 = vmatmul.mubr.f32.gmra.mrb[0].mxu0 %v577
        %v647 = vpop.f32.mrb[0].mxu0
        %v648 = vadd.f32 0.0, %v647
        %v649 = vpop.f32.mrb[0].mxu0
        %650 = vdwg.mxu0
        %v651 = vsel %vm411, %v648, -inf
        %652 = vmax.xlane.f32.xlu0 %v651
        %v653 = vpop.xlane.xlu0 %652
        %v654 = vsub.f32 %v648, %v653
        %v655 = vmul.f32 %v654, 1.442695
        %v656 = vpow.pop %v655
        %v657 = vsel %vm411, %v656, 0.0
        %658 = vadd.xlane.f32.xlu0 %v657
        %v659 = vpop.xlane.xlu0 %658
        %v660 = vrcp.pop %v659
        %v661 = vmul.f32 %v656, %v660
        %662 = vrot.lane.b32.xlu0 %v325, 48
        %v663 = vpop.permute.xlu0 %662
        %v666 = vsel %vm411, %v661, 0
        %668 = vmatprep.subr.mxu0 0.0
        %669 = vmatpush1.msra.mxu0 %v663
        %670 = vmatprep.subr.mxu0 0.0
        %671 = vmatpush1.msra.mxu0 0.0
        %672 = vmatprep.subr.mxu0 0.0
        %673 = vmatpush1.msra.mxu0 0.0
        %674 = vmatprep.subr.mxu0 0.0
        %675 = vmatpush1.msra.mxu0 0.0
        %676 = vmatprep.subr.mxu0 0.0
        %677 = vmatpush1.msra.mxu0 0.0
        %678 = vmatprep.subr.mxu0 0.0
        %679 = vmatpush1.msra.mxu0 0.0
        %680 = vmatprep.subr.mxu0 0.0
        %681 = vmatpush1.msra.mxu0 0.0
        %682 = vmatprep.subr.mxu0 0.0
        %683 = vmatpush1.msra.mxu0 0.0
        %684 = vmatprep.subr.mxu0 0.0
        %685 = vmatpush1.msra.mxu0 0.0
        %686 = vmatprep.subr.mxu0 0.0
        %687 = vmatpush1.msra.mxu0 0.0
        %688 = vmatprep.subr.mxu0 0.0
        %689 = vmatpush1.msra.mxu0 0.0
        %690 = vmatprep.subr.mxu0 0.0
        %691 = vmatpush1.msra.mxu0 0.0
        %692 = vmatprep.subr.mxu0 0.0
        %693 = vmatpush1.msra.mxu0 0.0
        %694 = vmatprep.subr.mxu0 0.0
        %695 = vmatpush1.msra.mxu0 0.0
        %696 = vmatprep.subr.mxu0 0.0
        %697 = vmatpush1.msra.mxu0 0.0
        %698 = vmatprep.subr.mxu0 0.0
        %699 = vmatpush1.msra.mxu0 0.0
        %700 = vmatprep.subr.mxu0 0.0
        %701 = vmatpush1.msra.mxu0 0.0
        %702 = vmatprep.subr.mxu0 0.0
        %703 = vmatpush1.msra.mxu0 0.0
        %704 = vmatprep.subr.mxu0 0.0
        %705 = vmatpush1.msra.mxu0 0.0
        %706 = vmatprep.subr.mxu0 0.0
        %707 = vmatpush1.msra.mxu0 0.0
        %708 = vmatprep.subr.mxu0 0.0
        %709 = vmatpush1.msra.mxu0 0.0
        %710 = vmatprep.subr.mxu0 0.0
        %711 = vmatpush1.msra.mxu0 0.0
        %712 = vmatprep.subr.mxu0 0.0
        %713 = vmatpush1.msra.mxu0 0.0
        %714 = vmatprep.subr.mxu0 0.0
        %715 = vmatpush1.msra.mxu0 0.0
        %716 = vmatprep.subr.mxu0 0.0
        %717 = vmatpush1.msra.mxu0 0.0
        %718 = vmatprep.subr.mxu0 0.0
        %719 = vmatpush1.msra.mxu0 0.0
        %720 = vmatprep.subr.mxu0 0.0
        %721 = vmatpush1.msra.mxu0 0.0
        %722 = vmatprep.subr.mxu0 0.0
        %723 = vmatpush1.msra.mxu0 0.0
        %724 = vmatprep.subr.mxu0 0.0
        %725 = vmatpush1.msra.mxu0 0.0
        %726 = vmatprep.subr.mxu0 0.0
        %727 = vmatpush1.msra.mxu0 0.0
        %728 = vmatprep.subr.mxu0 0.0
        %729 = vmatpush1.msra.mxu0 0.0
        %730 = vmatprep.subr.mxu0 0.0
        %731 = vmatpush1.msra.mxu0 0.0
        %732 = vmatprep.mubr.f32.mxu0 0.0
        %733 = vmatmul.mubr.f32.gmra.mrb[0].mxu0 %v666
        %v734 = vpop.f32.mrb[0].mxu0
        %v735 = vadd.f32 0.0, %v734
        %v736 = vpop.f32.mrb[0].mxu0
        %737 = vdwg.mxu0
        %v739 = vsel %vm336, %v735, 0
        %741 = vmatprep.subr.mxu0 0.0
        %742 = vmatpush1.msra.mxu0 %v245
        %743 = vmatprep.subr.mxu0 0.0
        %744 = vmatpush1.msra.mxu0 %v246
        %745 = vmatprep.subr.mxu0 0.0
        %746 = vmatpush1.msra.mxu0 0.0
        %747 = vmatprep.subr.mxu0 0.0
        %748 = vmatpush1.msra.mxu0 0.0
        %749 = vmatprep.subr.mxu0 0.0
        %750 = vmatpush1.msra.mxu0 0.0
        %751 = vmatprep.subr.mxu0 0.0
        %752 = vmatpush1.msra.mxu0 0.0
        %753 = vmatprep.subr.mxu0 0.0
        %754 = vmatpush1.msra.mxu0 0.0
        %755 = vmatprep.subr.mxu0 0.0
        %756 = vmatpush1.msra.mxu0 0.0
        %757 = vmatprep.subr.mxu0 0.0
        %758 = vmatpush1.msra.mxu0 0.0
        %759 = vmatprep.subr.mxu0 0.0
        %760 = vmatpush1.msra.mxu0 0.0
        %761 = vmatprep.subr.mxu0 0.0
        %762 = vmatpush1.msra.mxu0 0.0
        %763 = vmatprep.subr.mxu0 0.0
        %764 = vmatpush1.msra.mxu0 0.0
        %765 = vmatprep.subr.mxu0 0.0
        %766 = vmatpush1.msra.mxu0 0.0
        %767 = vmatprep.subr.mxu0 0.0
        %768 = vmatpush1.msra.mxu0 0.0
        %769 = vmatprep.subr.mxu0 0.0
        %770 = vmatpush1.msra.mxu0 0.0
        %771 = vmatprep.subr.mxu0 0.0
        %772 = vmatpush1.msra.mxu0 0.0
        %773 = vmatprep.subr.mxu0 0.0
        %774 = vmatpush1.msra.mxu0 0.0
        %775 = vmatprep.subr.mxu0 0.0
        %776 = vmatpush1.msra.mxu0 0.0
        %777 = vmatprep.subr.mxu0 0.0
        %778 = vmatpush1.msra.mxu0 0.0
        %779 = vmatprep.subr.mxu0 0.0
        %780 = vmatpush1.msra.mxu0 0.0
        %781 = vmatprep.subr.mxu0 0.0
        %782 = vmatpush1.msra.mxu0 0.0
        %783 = vmatprep.subr.mxu0 0.0
        %784 = vmatpush1.msra.mxu0 0.0
        %785 = vmatprep.subr.mxu0 0.0
        %786 = vmatpush1.msra.mxu0 0.0
        %787 = vmatprep.subr.mxu0 0.0
        %788 = vmatpush1.msra.mxu0 0.0
        %789 = vmatprep.subr.mxu0 0.0
        %790 = vmatpush1.msra.mxu0 0.0
        %791 = vmatprep.subr.mxu0 0.0
        %792 = vmatpush1.msra.mxu0 0.0
        %793 = vmatprep.subr.mxu0 0.0
        %794 = vmatpush1.msra.mxu0 0.0
        %795 = vmatprep.subr.mxu0 0.0
        %796 = vmatpush1.msra.mxu0 0.0
        %797 = vmatprep.subr.mxu0 0.0
        %798 = vmatpush1.msra.mxu0 0.0
        %799 = vmatprep.subr.mxu0 0.0
        %800 = vmatpush1.msra.mxu0 0.0
        %801 = vmatprep.subr.mxu0 0.0
        %802 = vmatpush1.msra.mxu0 0.0
        %803 = vmatprep.subr.mxu0 0.0
        %804 = vmatpush1.msra.mxu0 0.0
        %805 = vmatprep.mubr.f32.mxu0 0.0
        %806 = vmatmul.mubr.f32.gmra.mrb[0].mxu0 %v739
        %v807 = vpop.f32.mrb[0].mxu0
        %v808 = vadd.f32 0.0, %v807
        %v809 = vpop.f32.mrb[0].mxu0
        %810 = vdwg.mxu0
        %v811 = vadd.f32 %v572, %v808
        %v812 = vsel %vm254, %v811, 0.0
        %813 = vadd.xlane.f32.xlu0 %v812
        %v814 = vpop.xlane.xlu0 %813
        %v815 = vrcp.pop 32.0
        %v816 = vmul.f32 %v814, %v815
        %v817 = vsub.f32 %v811, %v816
        %v818 = vmul.f32 %v817, %v817
        %v819 = vsel %vm254, %v818, 0.0
        %820 = vadd.xlane.f32.xlu0 %v819
        %v821 = vpop.xlane.xlu0 %820
        %v822 = vmul.f32 %v821, %v815
        %v823 = vadd.f32 %v822, 1e-05
        %v824 = vrsqrt.pop %v823
        %v825 = vmul.f32 %v817, %v824
        %v826 = vlaneseq
        %v827 = vshrl.u32 %v826, 7
        %v828 = vsub.s32 0, %v827
        %v829 = vrot.slane %v248, %v828
        %v830 = vmul.f32 %v825, %v829
        %v831 = vlaneseq
        %v832 = vshrl.u32 %v831, 7
        %v833 = vsub.s32 0, %v832
        %v834 = vrot.slane %v249, %v833
        %v835 = vadd.f32 %v830, %v834
        %836 = vst.msk [vmem:[%s241] sm:$0xff] %vm254, %v835
        %s837 = sand.u32 %s119, 1
        %s838 = scalar_lea.sflag [#allocation4], %s837
        %s839 = sand.u32 %s119, 1
        %s840 = smul.addr %s839, 8
        %s841 = scalar_lea.vmem [#allocation8], %s840
        // Predicated region
        $region49: #{encoder_layer.1} parent=35 // pred_check
          %p842 = pneg %p129
        $region50: #{encoder_layer.1} parent=35 // pred_check_branch
          %844 = sbr.rel (%p842) target = $region52
        $region51: #{encoder_layer.1} parent=35 // pred_region
          %s846 = ssub.s32 128, 128
          %847 = vsyncadd %s838, %s846
          %s848 = smul.addr %s22, 128
          %s849 = scalar_lea.hbm %s4, %s848
          %s851 = sshll.u32 %s841, 4
          %s852 = int_to_ptr.vmem [resolvable:$true] %s851
          %854 = dma.vmem_to_hbm [thread:$0]  %s852, 128, %s849, %s838
        $region52: #{encoder_layer.1} parent=35 // pred_fallthru
          _
      $region36: #{encoder_layer.1} parent=5 // pred_fallthru
        _
      %p855 = scmp.le.s32.totalorder 2, %s17
      // Predicated region
      $region53: #{encoder_layer.1} parent=5 // pred_check
        %p856 = pneg %p855
      $region54: #{encoder_layer.1} parent=5 // pred_check_branch
        %858 = sbr.rel (%p856) target = $region56
      $region55: #{encoder_layer.1} parent=5 // pred_region
        %s859 = ssub.s32 %s17, 2
        // Predicated region
        $region57: #{encoder_layer.1} parent=55 // pred_check
          %p860 = pneg %p135
        $region58: #{encoder_layer.1} parent=55 // pred_check_branch
          %862 = sbr.rel (%p860) target = $region60
        $region59: #{encoder_layer.1} parent=55 // pred_region
          %s863 = sand.u32 %s120, 1
          %s864 = scalar_lea.sflag [#allocation4], %s863
          %s865 = sand.u32 %s120, 1
          %s866 = smul.addr %s865, 8
          %s867 = scalar_lea.vmem [#allocation8], %s866
          %868 = dma.done %s864, 128
        $region60: #{encoder_layer.1} parent=55 // pred_fallthru
          _
      $region56: #{encoder_layer.1} parent=5 // pred_fallthru
        _
    $region6: #{encoder_layer.1} parent=1 // loop_footer
      %s21 = sadd.s32 1, %s17
    $region7: #{encoder_layer.1} parent=1 // loop_footer_branch
      %16 = sbr.rel target = $region3
    $region8: #{encoder_layer.1} parent=1 // loop_exit
      _
    %869 = vsyncpa [#allocation3], 1
    %s870 = scalar_lea.sflag [#allocation3], 1
    %871 = vsyncpa %s870, 1
    %872 = vsyncpa [#allocation6], 1
    %873 = vsyncpa [#allocation4], 1
    %s874 = scalar_lea.sflag [#allocation4], 1
    %875 = vsyncpa %s874, 1

</llo_original>
